<compile_context>
chip_gen: v7x
topology: tpu7x:2x2x1
jax: 0.10.0
libtpu: 0.0.40
codegen_flags: <defaults>
</compile_context>

<pallas_src>
import functools
import math

import jax
import jax.numpy as jnp
import numpy as np
from jax.experimental import pallas as pl
from jax.experimental.pallas import tpu as pltpu

LOG_STD_MAX = 2
LOG_STD_MIN = -5


def _round_up(n, m):
    return ((n + m - 1) // m) * m


def actor_kernel(x_ref, wf_ref, bf_ref, g_ref, rm_ref, rl_ref,
                 mean_ref, ls_ref, *, router_lanes, topk):
    """One batch tile of Actor.forward(x, router_noise=False)."""
    x = x_ref[...].astype(jnp.float32)                          # [TB, D]
    EP = router_lanes                                           # 128-padded experts

    # ---- single fused matmul: router logits + all mean/log_std experts ------
    y = jnp.dot(x, wf_ref[...],
                preferred_element_type=jnp.float32) + bf_ref[...]       # [TB, WF]

    # ---- router softmax (lanes [0, EP); padded lanes carry -1e30 bias -> 0) -
    logits = y[:, :EP]                                                  # [TB, EP]
    mmax = jnp.max(logits, axis=-1, keepdims=True)
    ex = jnp.exp(logits - mmax)
    probs = ex * pl.reciprocal(jnp.sum(ex, axis=-1, keepdims=True))     # exact

    # ---- top-k sparse gating (iterative argmax, lowest-index tie-break;
    #      identical to torch.topk / lax.top_k).  Padded lanes have prob 0 and
    #      zero rows in G, so they can never contribute. --------------------
    iota_e = jax.lax.broadcasted_iota(jnp.int32, (1, EP), 1)
    work = probs
    sparse = jnp.zeros_like(probs)
    for _ in range(topk):
        mv = jnp.max(work, axis=-1, keepdims=True)
        eq = work == mv
        first = jnp.min(jnp.where(eq, iota_e, EP), axis=-1, keepdims=True)
        onehot = iota_e == first
        sparse = jnp.where(onehot, probs, sparse)
        work = jnp.where(onehot, -jnp.inf, work)

    # ---- broadcast gate over each expert's lanes (host-built 0/1 matrix) ----
    gate = jnp.dot(sparse, g_ref[...], preferred_element_type=jnp.float32)  # [TB, WF]
    gated = y * gate

    # ---- reduce over experts into two lane-dense 128-wide output slabs ------
    mean_ref[...] = jnp.dot(gated, rm_ref[...],
                            preferred_element_type=jnp.float32)            # [TB, AP]
    ls_raw = jnp.dot(gated, rl_ref[...],
                     preferred_element_type=jnp.float32)                   # [TB, AP]
    ls_ref[...] = (LOG_STD_MIN
                   + 0.5 * (LOG_STD_MAX - LOG_STD_MIN) * (jnp.tanh(ls_raw) + 1.0))


def actor_forward(x, packed_params, topk, act_dim, *, block_b=256):
    """Returns (mean, log_std) = Actor.forward(x, router_noise=False)."""
    wf, bf, G, Rm, Rl = packed_params
    B, D = x.shape
    EP, WF = G.shape
    AP = Rm.shape[1]
    A = act_dim

    # Batch tile: multiple of 8 sublanes; cap so the grid has >=2 steps when
    # B >= 16 (lets v7x megacore shard the "parallel" axis across its 2 TCs).
    TB = min(block_b, _round_up(B, 8))
    if B >= 16:
        TB = min(TB, _round_up((B + 1) // 2, 8))
    B_pad = _round_up(B, TB)
    if B_pad != B:
        x = jnp.pad(x, ((0, B_pad - B), (0, 0)))

    kernel = functools.partial(actor_kernel, router_lanes=EP, topk=topk)

    const = lambda i: (0, 0)
    mean_pad, ls_pad = pl.pallas_call(
        kernel,
        out_shape=(jax.ShapeDtypeStruct((B_pad, AP), jnp.float32),
                   jax.ShapeDtypeStruct((B_pad, AP), jnp.float32)),
        grid=(B_pad // TB,),
        in_specs=[
            pl.BlockSpec((TB, D), lambda i: (i, 0)),   # x (batch-tiled)
            pl.BlockSpec((D, WF), const),              # fused weight slab
            pl.BlockSpec((1, WF), const),              # fused bias slab
            pl.BlockSpec((EP, WF), const),             # gate-expand 0/1 matrix
            pl.BlockSpec((WF, AP), const),             # mean-reduce 0/1 matrix
            pl.BlockSpec((WF, AP), const),             # log_std-reduce 0/1 matrix
        ],
        out_specs=[
            pl.BlockSpec((TB, AP), lambda i: (i, 0)),  # mean  (lane-dense, 128 wide)
            pl.BlockSpec((TB, AP), lambda i: (i, 0)),  # log_std
        ],
        compiler_params=pltpu.CompilerParams(
            dimension_semantics=("parallel",)),
    )(x, wf, bf, G, Rm, Rl)

    return mean_pad[:B, :A], ls_pad[:B, :A]


def init_params(key, obs_dim, act_dim, n_experts):
    """Deterministic nn.Linear-style init: U(-1/sqrt(fan_in), 1/sqrt(fan_in)).

    Layout mirrors the PyTorch module: per-expert [D, A] weights stacked on a
    leading expert axis.
    """
    ks = jax.random.split(key, 6)
    bound = 1.0 / math.sqrt(obs_dim)
    u = lambda k, shape: jax.random.uniform(k, shape, jnp.float32, -bound, bound)
    wr = u(ks[0], (obs_dim, n_experts))
    br = u(ks[1], (1, n_experts))
    wm = u(ks[2], (n_experts, obs_dim, act_dim))
    bm = u(ks[3], (n_experts, 1, act_dim))
    ws = u(ks[4], (n_experts, obs_dim, act_dim))
    bs = u(ks[5], (n_experts, 1, act_dim))
    return wr, br, wm, bm, ws, bs


def pack_params(params):
    """One-time repack into the lane-dense layout the kernel consumes.

    Column layout of the fused slab (width WF = 128 + 2*E*A):
      [ router: E real cols + (-1e30-bias) padding to 128 |
        mean_e0..mean_e{E-1} (A cols each) | log_std_e0..log_std_e{E-1} ]
    Also builds the host-side constant 0/1 matrices:
      G      [128, WF]  gate-expand  (row e -> that expert's mean/log_std cols)
      R_mean [WF, 128]  sum-over-experts into mean lanes  (cols >= A are zero)
      R_ls   [WF, 128]  sum-over-experts into log_std lanes
    """
    wr, br, wm, bm, ws, bs = params
    E, D, A = wm.shape
    EP = _round_up(E, 128)
    EA = E * A
    WF = EP + 2 * EA
    AP = _round_up(A, 128)

    w_fused = np.zeros((D, WF), np.float32)
    w_fused[:, :E] = np.asarray(wr)
    w_fused[:, EP:EP + EA] = np.asarray(jnp.transpose(wm, (1, 0, 2))).reshape(D, EA)
    w_fused[:, EP + EA:] = np.asarray(jnp.transpose(ws, (1, 0, 2))).reshape(D, EA)

    b_fused = np.zeros((1, WF), np.float32)
    b_fused[:, :E] = np.asarray(br)
    b_fused[:, E:EP] = -1e30                       # padded router lanes -> prob 0
    b_fused[:, EP:EP + EA] = np.asarray(bm).reshape(1, EA)
    b_fused[:, EP + EA:] = np.asarray(bs).reshape(1, EA)

    col = np.arange(WF)
    expert_of_col = np.where(col >= EP, ((col - EP) % EA) // A, -1)
    G = (expert_of_col[None, :] == np.arange(EP)[:, None]).astype(np.float32)

    a_of_col = np.where(col >= EP, (col - EP) % A, -1)
    is_mean = (col >= EP) & (col < EP + EA)
    is_ls = col >= EP + EA
    j = np.arange(AP)
    R_mean = ((a_of_col[:, None] == j[None, :]) & is_mean[:, None]).astype(np.float32)
    R_ls = ((a_of_col[:, None] == j[None, :]) & is_ls[:, None]).astype(np.float32)

    return (jnp.asarray(w_fused), jnp.asarray(b_fused),
            jnp.asarray(G), jnp.asarray(R_mean), jnp.asarray(R_ls))


def actor_reference(x, params, topk):
    """Pure-JAX reference mirroring the PyTorch forward (router_noise=False)."""
    wr, br, wm, bm, ws, bs = params
    E = wr.shape[1]
    A = wm.shape[-1]
    logits = x @ wr + br.reshape(-1)
    probs = jax.nn.softmax(logits, axis=-1)
    topv, topi = jax.lax.top_k(probs, topk)
    sparse = jnp.sum(jax.nn.one_hot(topi, E, dtype=probs.dtype) * topv[..., None],
                     axis=1)                                   # [B, E]
    expert_out = jnp.einsum('bd,eda->bea', x, wm) + bm.reshape(E, A)[None]
    ls_out = jnp.einsum('bd,eda->bea', x, ws) + bs.reshape(E, A)[None]
    mean = jnp.sum(expert_out * sparse[..., None], axis=1)
    log_std = jnp.sum(ls_out * sparse[..., None], axis=1)
    log_std = jnp.tanh(log_std)
    log_std = LOG_STD_MIN + 0.5 * (LOG_STD_MAX - LOG_STD_MIN) * (log_std + 1.0)
    return mean, log_std


if __name__ == "__main__":
    # Small config: obs_dim=32, act_dim=8, n_experts=8, topk=2, batch=8.
    B, OBS, ACT, N_EXPERTS, TOPK = 8, 32, 8, 8, 2

    key = jax.random.PRNGKey(0)
    k_x, k_p, k_x2 = jax.random.split(key, 3)
    x = jax.random.normal(k_x, (B, OBS), jnp.float32)
    params = init_params(k_p, OBS, ACT, N_EXPERTS)
    packed = pack_params(params)          # one-time lane-dense weight repack

    mean, log_std = actor_forward(x, packed, TOPK, ACT)
    jax.block_until_ready((mean, log_std))

    mean_ref, log_std_ref = actor_reference(x, params, TOPK)
    np.testing.assert_allclose(np.asarray(mean), np.asarray(mean_ref),
                               rtol=5e-5, atol=5e-5)
    np.testing.assert_allclose(np.asarray(log_std), np.asarray(log_std_ref),
                               rtol=5e-5, atol=5e-5)

    # Second check: batch not a multiple of the tile -> exercises zero-padding
    # and a multi-step "parallel" grid (megacore-shardable on v7x).
    B2 = 40
    x2 = jax.random.normal(k_x2, (B2, OBS), jnp.float32)
    mean2, log_std2 = actor_forward(x2, packed, TOPK, ACT, block_b=16)
    jax.block_until_ready((mean2, log_std2))
    mean2_ref, log_std2_ref = actor_reference(x2, params, TOPK)
    np.testing.assert_allclose(np.asarray(mean2), np.asarray(mean2_ref),
                               rtol=5e-5, atol=5e-5)
    np.testing.assert_allclose(np.asarray(log_std2), np.asarray(log_std2_ref),
                               rtol=5e-5, atol=5e-5)

    print("KERNEL_OK")
</pallas_src>

<mosaic_0001>
module attributes {stable_mosaic.version = 11 : i64} {
  func.func @actor_kernel(%arg0: i32, %arg1: memref<8x32xf32, #tpu.memory_space<vmem>>, %arg2: memref<32x256xf32, #tpu.memory_space<vmem>>, %arg3: memref<1x256xf32, #tpu.memory_space<vmem>>, %arg4: memref<128x256xf32, #tpu.memory_space<vmem>>, %arg5: memref<256x128xf32, #tpu.memory_space<vmem>>, %arg6: memref<256x128xf32, #tpu.memory_space<vmem>>, %arg7: memref<8x128xf32, #tpu.memory_space<vmem>>, %arg8: memref<8x128xf32, #tpu.memory_space<vmem>>) attributes {dimension_semantics = [#tpu.dimension_semantics<parallel>], iteration_bounds = array<i64: 1>, scalar_prefetch = 0 : i64, scratch_operands = 0 : i64, tpu.core_type = #tpu.core_type<tc>, window_params = [{transform_indices = @transform_0, window_bounds = array<i64: 8, 32>}, {pipeline_mode = #tpu.pipeline_mode<synchronous>, transform_indices = @transform_1, window_bounds = array<i64: 32, 256>}, {pipeline_mode = #tpu.pipeline_mode<synchronous>, transform_indices = @transform_2, window_bounds = array<i64: 1, 256>}, {pipeline_mode = #tpu.pipeline_mode<synchronous>, transform_indices = @transform_3, window_bounds = array<i64: 128, 256>}, {pipeline_mode = #tpu.pipeline_mode<synchronous>, transform_indices = @transform_4, window_bounds = array<i64: 256, 128>}, {pipeline_mode = #tpu.pipeline_mode<synchronous>, transform_indices = @transform_5, window_bounds = array<i64: 256, 128>}, {transform_indices = @transform_6, window_bounds = array<i64: 8, 128>}, {transform_indices = @transform_7, window_bounds = array<i64: 8, 128>}]} {
    %c0 = arith.constant 0 : index
    %c0_0 = arith.constant 0 : index
    %0 = vector.load %arg1[%c0, %c0_0] : memref<8x32xf32, #tpu.memory_space<vmem>>, vector<8x32xf32>
    %c0_1 = arith.constant 0 : index
    %c0_2 = arith.constant 0 : index
    %1 = vector.load %arg2[%c0_1, %c0_2] : memref<32x256xf32, #tpu.memory_space<vmem>>, vector<32x256xf32>
    %cst = arith.constant dense<0.000000e+00> : vector<8x256xf32>
    %2 = tpu.matmul %0, %1, %cst {dimension_numbers = #tpu.dot_dimension_numbers<[1], [0], [0], [1], [0, 0, 1, 1], [], []>} : vector<8x32xf32>, vector<32x256xf32>, vector<8x256xf32> -> vector<8x256xf32>
    %c0_3 = arith.constant 0 : index
    %c0_4 = arith.constant 0 : index
    %3 = vector.load %arg3[%c0_3, %c0_4] : memref<1x256xf32, #tpu.memory_space<vmem>>, vector<1x256xf32>
    %4 = vector.broadcast %3 : vector<1x256xf32> to vector<8x256xf32>
    %5 = arith.addf %2, %4 : vector<8x256xf32>
    %6 = vector.extract_strided_slice %5 {offsets = [0, 0], sizes = [8, 128], strides = [1, 1]} : vector<8x256xf32> to vector<8x128xf32>
    %cst_5 = arith.constant dense<0xFF800000> : vector<8xf32>
    %7 = vector.multi_reduction <maximumf>, %6, %cst_5 [1] : vector<8x128xf32> to vector<8xf32>
    %8 = vector.shape_cast %7 : vector<8xf32> to vector<8x1xf32>
    %9 = vector.broadcast %8 : vector<8x1xf32> to vector<8x128xf32>
    %10 = arith.subf %6, %9 : vector<8x128xf32>
    %11 = math.exp %10 : vector<8x128xf32>
    %cst_6 = arith.constant dense<0.000000e+00> : vector<8xf32>
    %12 = vector.multi_reduction <add>, %11, %cst_6 [1] : vector<8x128xf32> to vector<8xf32>
    %13 = vector.shape_cast %12 : vector<8xf32> to vector<8x1xf32>
    %14 = tpu.reciprocal %13 : vector<8x1xf32> -> vector<8x1xf32>
    %15 = vector.broadcast %14 : vector<8x1xf32> to vector<8x128xf32>
    %16 = arith.mulf %11, %15 : vector<8x128xf32>
    %17 = tpu.iota {dimensions = array<i32: 1>} : vector<1x128xi32>
    %cst_7 = arith.constant 0.000000e+00 : f32
    %18 = vector.broadcast %cst_7 : f32 to vector<8x128xf32>
    %cst_8 = arith.constant dense<0xFF800000> : vector<8xf32>
    %19 = vector.multi_reduction <maximumf>, %16, %cst_8 [1] : vector<8x128xf32> to vector<8xf32>
    %20 = vector.shape_cast %19 : vector<8xf32> to vector<8x1xf32>
    %21 = vector.broadcast %20 : vector<8x1xf32> to vector<8x128xf32>
    %22 = arith.cmpf oeq, %16, %21 : vector<8x128xf32>
    %c128_i32 = arith.constant 128 : i32
    %23 = vector.shape_cast %17 : vector<1x128xi32> to vector<1x128xi32>
    %24 = vector.broadcast %23 : vector<1x128xi32> to vector<8x128xi32>
    %25 = vector.broadcast %c128_i32 : i32 to vector<8x128xi32>
    %26 = arith.select %22, %24, %25 : vector<8x128xi1>, vector<8x128xi32>
    %cst_9 = arith.constant dense<2147483647> : vector<8xi32>
    %27 = vector.multi_reduction <minsi>, %26, %cst_9 [1] : vector<8x128xi32> to vector<8xi32>
    %28 = vector.shape_cast %27 : vector<8xi32> to vector<8x1xi32>
    %29 = vector.broadcast %17 : vector<1x128xi32> to vector<8x128xi32>
    %30 = vector.broadcast %28 : vector<8x1xi32> to vector<8x128xi32>
    %31 = arith.cmpi eq, %29, %30 : vector<8x128xi32>
    %32 = arith.select %31, %16, %18 : vector<8x128xi1>, vector<8x128xf32>
    %cst_10 = arith.constant 0xFF800000 : f32
    %33 = vector.broadcast %cst_10 : f32 to vector<8x128xf32>
    %34 = arith.select %31, %33, %16 : vector<8x128xi1>, vector<8x128xf32>
    %cst_11 = arith.constant dense<0xFF800000> : vector<8xf32>
    %35 = vector.multi_reduction <maximumf>, %34, %cst_11 [1] : vector<8x128xf32> to vector<8xf32>
    %36 = vector.shape_cast %35 : vector<8xf32> to vector<8x1xf32>
    %37 = vector.broadcast %36 : vector<8x1xf32> to vector<8x128xf32>
    %38 = arith.cmpf oeq, %34, %37 : vector<8x128xf32>
    %c128_i32_12 = arith.constant 128 : i32
    %39 = vector.shape_cast %17 : vector<1x128xi32> to vector<1x128xi32>
    %40 = vector.broadcast %39 : vector<1x128xi32> to vector<8x128xi32>
    %41 = vector.broadcast %c128_i32_12 : i32 to vector<8x128xi32>
    %42 = arith.select %38, %40, %41 : vector<8x128xi1>, vector<8x128xi32>
    %cst_13 = arith.constant dense<2147483647> : vector<8xi32>
    %43 = vector.multi_reduction <minsi>, %42, %cst_13 [1] : vector<8x128xi32> to vector<8xi32>
    %44 = vector.shape_cast %43 : vector<8xi32> to vector<8x1xi32>
    %45 = vector.broadcast %17 : vector<1x128xi32> to vector<8x128xi32>
    %46 = vector.broadcast %44 : vector<8x1xi32> to vector<8x128xi32>
    %47 = arith.cmpi eq, %45, %46 : vector<8x128xi32>
    %48 = arith.select %47, %16, %32 : vector<8x128xi1>, vector<8x128xf32>
    %c0_14 = arith.constant 0 : index
    %c0_15 = arith.constant 0 : index
    %49 = vector.load %arg4[%c0_14, %c0_15] : memref<128x256xf32, #tpu.memory_space<vmem>>, vector<128x256xf32>
    %cst_16 = arith.constant dense<0.000000e+00> : vector<8x256xf32>
    %50 = tpu.matmul %48, %49, %cst_16 {dimension_numbers = #tpu.dot_dimension_numbers<[1], [0], [0], [1], [0, 0, 1, 1], [], []>} : vector<8x128xf32>, vector<128x256xf32>, vector<8x256xf32> -> vector<8x256xf32>
    %51 = arith.mulf %5, %50 : vector<8x256xf32>
    %c0_17 = arith.constant 0 : index
    %c0_18 = arith.constant 0 : index
    %52 = vector.load %arg5[%c0_17, %c0_18] : memref<256x128xf32, #tpu.memory_space<vmem>>, vector<256x128xf32>
    %cst_19 = arith.constant dense<0.000000e+00> : vector<8x128xf32>
    %53 = tpu.matmul %51, %52, %cst_19 {dimension_numbers = #tpu.dot_dimension_numbers<[1], [0], [0], [1], [0, 0, 1, 1], [], []>} : vector<8x256xf32>, vector<256x128xf32>, vector<8x128xf32> -> vector<8x128xf32>
    %c0_20 = arith.constant 0 : index
    %c0_21 = arith.constant 0 : index
    %54 = vector.load %arg7[%c0_20, %c0_21] : memref<8x128xf32, #tpu.memory_space<vmem>>, vector<8x128xf32>
    tpu.vector_store %arg7[%c0_20, %c0_21], %53 {strides = array<i32>} : memref<8x128xf32, #tpu.memory_space<vmem>>, vector<8x128xf32>,
    %c0_22 = arith.constant 0 : index
    %c0_23 = arith.constant 0 : index
    %55 = vector.load %arg6[%c0_22, %c0_23] : memref<256x128xf32, #tpu.memory_space<vmem>>, vector<256x128xf32>
    %cst_24 = arith.constant dense<0.000000e+00> : vector<8x128xf32>
    %56 = tpu.matmul %51, %55, %cst_24 {dimension_numbers = #tpu.dot_dimension_numbers<[1], [0], [0], [1], [0, 0, 1, 1], [], []>} : vector<8x256xf32>, vector<256x128xf32>, vector<8x128xf32> -> vector<8x128xf32>
    %57 = math.tanh %56 : vector<8x128xf32>
    %cst_25 = arith.constant 1.000000e+00 : f32
    %58 = vector.broadcast %cst_25 : f32 to vector<8x128xf32>
    %59 = arith.addf %57, %58 : vector<8x128xf32>
    %cst_26 = arith.constant 3.500000e+00 : f32
    %60 = vector.broadcast %cst_26 : f32 to vector<8x128xf32>
    %61 = arith.mulf %60, %59 : vector<8x128xf32>
    %cst_27 = arith.constant -5.000000e+00 : f32
    %62 = vector.broadcast %cst_27 : f32 to vector<8x128xf32>
    %63 = arith.addf %62, %61 : vector<8x128xf32>
    %c0_28 = arith.constant 0 : index
    %c0_29 = arith.constant 0 : index
    %64 = vector.load %arg8[%c0_28, %c0_29] : memref<8x128xf32, #tpu.memory_space<vmem>>, vector<8x128xf32>
    tpu.vector_store %arg8[%c0_28, %c0_29], %63 {strides = array<i32>} : memref<8x128xf32, #tpu.memory_space<vmem>>, vector<8x128xf32>,
    return
  }
  func.func @transform_0(%arg0: i32) -> (i32, i32) {
    %c0_i32 = arith.constant 0 : i32
    %c0_i32_0 = arith.constant 0 : i32
    return %arg0, %c0_i32 : i32, i32
  }
  func.func @transform_1(%arg0: i32) -> (i32, i32) {
    %c0_i32 = arith.constant 0 : i32
    %c0_i32_0 = arith.constant 0 : i32
    %c0_i32_1 = arith.constant 0 : i32
    return %c0_i32, %c0_i32_0 : i32, i32
  }
  func.func @transform_2(%arg0: i32) -> (i32, i32) {
    %c0_i32 = arith.constant 0 : i32
    %c0_i32_0 = arith.constant 0 : i32
    %c0_i32_1 = arith.constant 0 : i32
    return %c0_i32, %c0_i32_0 : i32, i32
  }
  func.func @transform_3(%arg0: i32) -> (i32, i32) {
    %c0_i32 = arith.constant 0 : i32
    %c0_i32_0 = arith.constant 0 : i32
    %c0_i32_1 = arith.constant 0 : i32
    return %c0_i32, %c0_i32_0 : i32, i32
  }
  func.func @transform_4(%arg0: i32) -> (i32, i32) {
    %c0_i32 = arith.constant 0 : i32
    %c0_i32_0 = arith.constant 0 : i32
    %c0_i32_1 = arith.constant 0 : i32
    return %c0_i32, %c0_i32_0 : i32, i32
  }
  func.func @transform_5(%arg0: i32) -> (i32, i32) {
    %c0_i32 = arith.constant 0 : i32
    %c0_i32_0 = arith.constant 0 : i32
    %c0_i32_1 = arith.constant 0 : i32
    return %c0_i32, %c0_i32_0 : i32, i32
  }
  func.func @transform_6(%arg0: i32) -> (i32, i32) {
    %c0_i32 = arith.constant 0 : i32
    %c0_i32_0 = arith.constant 0 : i32
    return %arg0, %c0_i32 : i32, i32
  }
  func.func @transform_7(%arg0: i32) -> (i32, i32) {
    %c0_i32 = arith.constant 0 : i32
    %c0_i32_0 = arith.constant 0 : i32
    return %arg0, %c0_i32 : i32, i32
  }
}

</mosaic_0001>

<llo_original>
// kernel: tpu_custom_call.1
$region0: #{tpu_custom_call.1}
  #allocation0 [shape = 'u32[]', space=smem, size = 0x4, offset = 0x4, fixed_abs, tag = 'smem constant byte address 0x4 - core index']
  #allocation1 [shape = 'u32[144,128]{1,0:T(1,128)}', space=vmem, size = 0x12000, scoped, tag = 'internal scratch']
  %s0 = inlined_call_operand.hbm [shape: f32[8,32], index: 0, kind: input, shape index: {}]
  %s1 = inlined_call_operand.hbm [shape: f32[32,256], index: 1, kind: input, shape index: {}]
  %s2 = inlined_call_operand.vmem [shape: f32[1,256], index: 2, kind: input, shape index: {}]
  %s3 = inlined_call_operand.hbm [shape: f32[128,256], index: 3, kind: input, shape index: {}]
  %s4 = inlined_call_operand.hbm [shape: f32[256,128], index: 4, kind: input, shape index: {}]
  %s5 = inlined_call_operand.hbm [shape: f32[256,128], index: 5, kind: input, shape index: {}]
  %s6 = inlined_call_operand.hbm [shape: f32[8,128], index: 6, kind: output, shape index: {0}]
  %s7 = inlined_call_operand.hbm [shape: f32[8,128], index: 7, kind: output, shape index: {1}]
  %8 = xla_tuple %s6, %s7
  %s9 = sld [smem:[#allocation0]]
  $region62: #{tpu_custom_call.1} parent=0
    _
  %s11 = ssub.s32 1, %s9
  %s12 = scalar_select 0, %s11, %s9
  $region1: #{tpu_custom_call.1} parent=0
    #allocation2 [shape = 'u8[4096]{0}', space=vmem, size = 0x1000, scoped, tag = 'input window, operand 0, single buffered']
    #allocation3 [shape = 's32[1]{0}', space=sflag, size = 0x4, scoped, tag = 'scoped memory for tpu_custom_call.1']
    #allocation4 [shape = 's32[1]{0}', space=sflag, size = 0x4, scoped, tag = 'scoped memory for tpu_custom_call.1']
    #allocation5 [shape = 'u8[32768]{0}', space=vmem, size = 0x8000, scoped, tag = 'input window, operand 1, single buffered']
    #allocation6 [shape = 's32[1]{0}', space=sflag, size = 0x4, scoped, tag = 'scoped memory for tpu_custom_call.1']
    #allocation7 [shape = 'u8[131072]{0}', space=vmem, size = 0x20000, scoped, tag = 'input window, operand 3, single buffered']
    #allocation8 [shape = 'u8[131072]{0}', space=vmem, size = 0x20000, scoped, tag = 'input window, operand 4, single buffered']
    #allocation9 [shape = 's32[1]{0}', space=sflag, size = 0x4, scoped, tag = 'scoped memory for tpu_custom_call.1']
    #allocation10 [shape = 'u8[131072]{0}', space=vmem, size = 0x20000, scoped, tag = 'input window, operand 5, single buffered']
    #allocation11 [shape = 'u8[4096]{0}', space=vmem, size = 0x1000, scoped, tag = 'output window, operand 0, single buffered']
    #allocation12 [shape = 'u8[4096]{0}', space=vmem, size = 0x1000, scoped, tag = 'output window, operand 1, single buffered']
    #allocation13 [shape = 's32[1]{0}', space=sflag, size = 0x4, scoped, tag = 'scoped memory for tpu_custom_call.1']
    %13 = vsyncpa [#allocation3], 0
    %14 = vsyncpa [#allocation6], 0
    %15 = vsyncpa [#allocation9], 0
    %16 = vsyncpa [#allocation4], 0
    %17 = vsyncpa [#allocation13], 0
    // Predicated region
    $region2: #{tpu_custom_call.1} parent=1 // pred_check
      _
    $region3: #{tpu_custom_call.1} parent=1 // pred_check_branch
      %19 = sbr.rel (0) target = $region5
    $region4: #{tpu_custom_call.1} parent=1 // pred_region
      %s21 = ssub.s32 128, 128
      %22 = vsyncadd [#allocation3], %s21
      %s24 = sshll.u32 [#allocation2], 4
      %s25 = int_to_ptr.vmem [resolvable:$true] %s24
      %27 = dma.hbm_to_vmem [thread:$0]  %s0, 128, %s25, [#allocation3]
    $region5: #{tpu_custom_call.1} parent=1 // pred_fallthru
      _
    // Predicated region
    $region6: #{tpu_custom_call.1} parent=1 // pred_check
      _
    $region7: #{tpu_custom_call.1} parent=1 // pred_check_branch
      %29 = sbr.rel (0) target = $region9
    $region8: #{tpu_custom_call.1} parent=1 // pred_region
      %s31 = ssub.s32 1024, 1024
      %32 = vsyncadd [#allocation6], %s31
      %s33 = sshll.u32 [#allocation5], 4
      %s34 = int_to_ptr.vmem [resolvable:$true] %s33
      %39 = dma.hbm_to_vmem [thread:$0]  %s1, 1024, %s34, [#allocation6], 256, 256, 16
    $region9: #{tpu_custom_call.1} parent=1 // pred_fallthru
      _
    // Predicated region
    $region10: #{tpu_custom_call.1} parent=1 // pred_check
      _
    $region11: #{tpu_custom_call.1} parent=1 // pred_check_branch
      %41 = sbr.rel (0) target = $region13
    $region12: #{tpu_custom_call.1} parent=1 // pred_region
      _
    $region13: #{tpu_custom_call.1} parent=1 // pred_fallthru
      _
    // Predicated region
    $region14: #{tpu_custom_call.1} parent=1 // pred_check
      _
    $region15: #{tpu_custom_call.1} parent=1 // pred_check_branch
      %43 = sbr.rel (0) target = $region17
    $region16: #{tpu_custom_call.1} parent=1 // pred_region
      %s45 = ssub.s32 4096, 4096
      %46 = vsyncadd [#allocation6], %s45
      %s47 = sshll.u32 [#allocation7], 4
      %s48 = int_to_ptr.vmem [resolvable:$true] %s47
      %53 = dma.hbm_to_vmem [thread:$0]  %s3, 4096, %s48, [#allocation6], 256, 256, 16
    $region17: #{tpu_custom_call.1} parent=1 // pred_fallthru
      _
    // Predicated region
    $region18: #{tpu_custom_call.1} parent=1 // pred_check
      _
    $region19: #{tpu_custom_call.1} parent=1 // pred_check_branch
      %55 = sbr.rel (0) target = $region21
    $region20: #{tpu_custom_call.1} parent=1 // pred_region
      %s57 = ssub.s32 4096, 4096
      %58 = vsyncadd [#allocation9], %s57
      %s59 = sshll.u32 [#allocation8], 4
      %s60 = int_to_ptr.vmem [resolvable:$true] %s59
      %65 = dma.hbm_to_vmem [thread:$0]  %s4, 4096, %s60, [#allocation9], 128, 128, 8
    $region21: #{tpu_custom_call.1} parent=1 // pred_fallthru
      _
    // Predicated region
    $region22: #{tpu_custom_call.1} parent=1 // pred_check
      _
    $region23: #{tpu_custom_call.1} parent=1 // pred_check_branch
      %67 = sbr.rel (0) target = $region25
    $region24: #{tpu_custom_call.1} parent=1 // pred_region
      %s69 = ssub.s32 4096, 4096
      %70 = vsyncadd [#allocation9], %s69
      %s71 = sshll.u32 [#allocation10], 4
      %s72 = int_to_ptr.vmem [resolvable:$true] %s71
      %77 = dma.hbm_to_vmem [thread:$0]  %s5, 4096, %s72, [#allocation9], 128, 128, 8
    $region25: #{tpu_custom_call.1} parent=1 // pred_fallthru
      _
    // Predicated region
    $region26: #{tpu_custom_call.1} parent=1 // pred_check
      _
    $region27: #{tpu_custom_call.1} parent=1 // pred_check_branch
      %79 = sbr.rel (0) target = $region29
    $region28: #{tpu_custom_call.1} parent=1 // pred_region
      %80 = dma.done [#allocation3], 128
    $region29: #{tpu_custom_call.1} parent=1 // pred_fallthru
      _
    // Predicated region
    $region30: #{tpu_custom_call.1} parent=1 // pred_check
      _
    $region31: #{tpu_custom_call.1} parent=1 // pred_check_branch
      %82 = sbr.rel (0) target = $region33
    $region32: #{tpu_custom_call.1} parent=1 // pred_region
      %83 = dma.done [#allocation6], 1024
    $region33: #{tpu_custom_call.1} parent=1 // pred_fallthru
      _
    // Predicated region
    $region34: #{tpu_custom_call.1} parent=1 // pred_check
      _
    $region35: #{tpu_custom_call.1} parent=1 // pred_check_branch
      %85 = sbr.rel (0) target = $region37
    $region36: #{tpu_custom_call.1} parent=1 // pred_region
      %86 = dma.done [#allocation6], 4096
    $region37: #{tpu_custom_call.1} parent=1 // pred_fallthru
      _
    // Predicated region
    $region38: #{tpu_custom_call.1} parent=1 // pred_check
      _
    $region39: #{tpu_custom_call.1} parent=1 // pred_check_branch
      %88 = sbr.rel (0) target = $region41
    $region40: #{tpu_custom_call.1} parent=1 // pred_region
      %89 = dma.done [#allocation9], 4096
    $region41: #{tpu_custom_call.1} parent=1 // pred_fallthru
      _
    // Predicated region
    $region42: #{tpu_custom_call.1} parent=1 // pred_check
      _
    $region43: #{tpu_custom_call.1} parent=1 // pred_check_branch
      %91 = sbr.rel (0) target = $region45
    $region44: #{tpu_custom_call.1} parent=1 // pred_region
      %92 = dma.done [#allocation9], 4096
    $region45: #{tpu_custom_call.1} parent=1 // pred_fallthru
      _
    %v93 = vld [vmem:[#allocation2] sm:$0xff]
    %v94 = vld [vmem:[#allocation5] sm:$0xff]
    %v95 = vld [vmem:[#allocation5 + $0x8] sm:$0xff]
    %v96 = vld [vmem:[#allocation5 + $0x10] sm:$0xff]
    %v97 = vld [vmem:[#allocation5 + $0x18] sm:$0xff]
    %v98 = vld [vmem:[#allocation5 + $0x20] sm:$0xff]
    %v99 = vld [vmem:[#allocation5 + $0x28] sm:$0xff]
    %v100 = vld [vmem:[#allocation5 + $0x30] sm:$0xff]
    %v101 = vld [vmem:[#allocation5 + $0x38] sm:$0xff]
    %v102 = vld [vmem:[%s2] sm:$0x3]
    %v104 = vlaneseq
    %v105 = vshrl.u32 %v104, 7
    %v106 = vsub.s32 0, %v105
    %v107 = vrot.slane %v102, %v106
    %v108 = vlaneseq
    %v109 = vshrl.u32 %v108, 7
    %v110 = vsub.s32 1, %v109
    %v111 = vrot.slane %v102, %v110
    %vm114 = vcmask 261120
    %v116 = vsel %vm114, %v93, 0
    %118 = vmatprep.subr.mxu0 %v95
    %119 = vmatpush1.msra.mxu0 %v94
    %120 = vmatprep.subr.mxu0 %v97
    %121 = vmatpush1.msra.mxu0 %v96
    %122 = vmatprep.subr.mxu0 %v99
    %123 = vmatpush1.msra.mxu0 %v98
    %124 = vmatprep.subr.mxu0 %v101
    %125 = vmatpush1.msra.mxu0 %v100
    %126 = vmatprep.subr.mxu0 0.0
    %127 = vmatpush1.msra.mxu0 0.0
    %128 = vmatprep.subr.mxu0 0.0
    %129 = vmatpush1.msra.mxu0 0.0
    %130 = vmatprep.subr.mxu0 0.0
    %131 = vmatpush1.msra.mxu0 0.0
    %132 = vmatprep.subr.mxu0 0.0
    %133 = vmatpush1.msra.mxu0 0.0
    %134 = vmatprep.subr.mxu0 0.0
    %135 = vmatpush1.msra.mxu0 0.0
    %136 = vmatprep.subr.mxu0 0.0
    %137 = vmatpush1.msra.mxu0 0.0
    %138 = vmatprep.subr.mxu0 0.0
    %139 = vmatpush1.msra.mxu0 0.0
    %140 = vmatprep.subr.mxu0 0.0
    %141 = vmatpush1.msra.mxu0 0.0
    %142 = vmatprep.subr.mxu0 0.0
    %143 = vmatpush1.msra.mxu0 0.0
    %144 = vmatprep.subr.mxu0 0.0
    %145 = vmatpush1.msra.mxu0 0.0
    %146 = vmatprep.subr.mxu0 0.0
    %147 = vmatpush1.msra.mxu0 0.0
    %148 = vmatprep.subr.mxu0 0.0
    %149 = vmatpush1.msra.mxu0 0.0
    %150 = vmatprep.subr.mxu0 0.0
    %151 = vmatpush1.msra.mxu0 0.0
    %152 = vmatprep.subr.mxu0 0.0
    %153 = vmatpush1.msra.mxu0 0.0
    %154 = vmatprep.subr.mxu0 0.0
    %155 = vmatpush1.msra.mxu0 0.0
    %156 = vmatprep.subr.mxu0 0.0
    %157 = vmatpush1.msra.mxu0 0.0
    %158 = vmatprep.subr.mxu0 0.0
    %159 = vmatpush1.msra.mxu0 0.0
    %160 = vmatprep.subr.mxu0 0.0
    %161 = vmatpush1.msra.mxu0 0.0
    %162 = vmatprep.subr.mxu0 0.0
    %163 = vmatpush1.msra.mxu0 0.0
    %164 = vmatprep.subr.mxu0 0.0
    %165 = vmatpush1.msra.mxu0 0.0
    %166 = vmatprep.subr.mxu0 0.0
    %167 = vmatpush1.msra.mxu0 0.0
    %168 = vmatprep.subr.mxu0 0.0
    %169 = vmatpush1.msra.mxu0 0.0
    %170 = vmatprep.subr.mxu0 0.0
    %171 = vmatpush1.msra.mxu0 0.0
    %172 = vmatprep.subr.mxu0 0.0
    %173 = vmatpush1.msra.mxu0 0.0
    %174 = vmatprep.subr.mxu0 0.0
    %175 = vmatpush1.msra.mxu0 0.0
    %176 = vmatprep.subr.mxu0 0.0
    %177 = vmatpush1.msra.mxu0 0.0
    %178 = vmatprep.subr.mxu0 0.0
    %179 = vmatpush1.msra.mxu0 0.0
    %180 = vmatprep.subr.mxu0 0.0
    %181 = vmatpush1.msra.mxu0 0.0
    %182 = vmatprep.mubr.f32.mxu0 0.0
    %183 = vmatmul.mubr.f32.gmra.mrb[0].mxu0 %v116
    %v184 = vpop.f32.mrb[0].mxu0
    %v185 = vadd.f32 %v107, %v184
    %v186 = vpop.f32.mrb[0].mxu0
    %v187 = vadd.f32 %v111, %v186
    %188 = vdwg.mxu0
    %189 = vmax.xlane.f32.xlu0 %v185
    %v190 = vpop.xlane.xlu0 %189
    %v191 = vsub.f32 %v185, %v190
    %v192 = vmul.f32 %v191, 1.442695
    %v193 = vpow.pop %v192
    %194 = vadd.xlane.f32.xlu0 %v193
    %v195 = vpop.xlane.xlu0 %194
    %v196 = vrcp.pop %v195
    %v197 = vmul.f32 %v193, %v196
    %v198 = vlaneseq
    %v199 = vand.u32 %v198, 127
    %200 = vmax.xlane.f32.xlu0 %v197
    %v201 = vpop.xlane.xlu0 %200
    %vm202 = vcmp.eq.f32.partialorder %v197, %v201
    %v203 = vsel %vm202, %v199, 128
    %v204 = vand.u32 %v203, 65535
    %v205 = vshra.s32 %v203, 16
    %v206 = vcvt.s32.f32 %v204
    %v207 = vcvt.s32.f32 %v205
    %208 = vmin.xlane.f32.xlu0 %v207
    %v209 = vpop.xlane.xlu0 %208
    %vm210 = vcmp.eq.f32.partialorder %v207, %v209
    %v211 = vsel %vm210, %v206, inf
    %212 = vmin.xlane.f32.xlu0 %v211
    %v213 = vpop.xlane.xlu0 %212
    %v214 = vcvt.f32.s32 %v213
    %v215 = vcvt.f32.s32 %v209
    %v216 = vshll.u32 %v215, 16
    %v217 = vadd.s32 %v216, %v214
    %vm218 = vcmp.eq.s32.totalorder %v199, %v217
    %v219 = vsel %vm218, %v197, 0.0
    %v220 = vsel %vm218, -inf, %v197
    %221 = vmax.xlane.f32.xlu0 %v220
    %v222 = vpop.xlane.xlu0 %221
    %vm223 = vcmp.eq.f32.partialorder %v220, %v222
    %v224 = vsel %vm223, %v199, 128
    %v225 = vand.u32 %v224, 65535
    %v226 = vshra.s32 %v224, 16
    %v227 = vcvt.s32.f32 %v225
    %v228 = vcvt.s32.f32 %v226
    %229 = vmin.xlane.f32.xlu0 %v228
    %v230 = vpop.xlane.xlu0 %229
    %vm231 = vcmp.eq.f32.partialorder %v228, %v230
    %v232 = vsel %vm231, %v227, inf
    %233 = vmin.xlane.f32.xlu0 %v232
    %v234 = vpop.xlane.xlu0 %233
    %v235 = vcvt.f32.s32 %v234
    %v236 = vcvt.f32.s32 %v230
    %v237 = vshll.u32 %v236, 16
    %v238 = vadd.s32 %v237, %v235
    %vm239 = vcmp.eq.s32.totalorder %v199, %v238
    %v240 = vsel %vm239, %v197, %v219
    %v241 = vld [vmem:[#allocation7] sm:$0xff]
    %v242 = vld [vmem:[#allocation7 + $0x8] sm:$0xff]
    %v243 = vld [vmem:[#allocation7 + $0x10] sm:$0xff]
    %v244 = vld [vmem:[#allocation7 + $0x18] sm:$0xff]
    %v245 = vld [vmem:[#allocation7 + $0x20] sm:$0xff]
    %v246 = vld [vmem:[#allocation7 + $0x28] sm:$0xff]
    %v247 = vld [vmem:[#allocation7 + $0x30] sm:$0xff]
    %v248 = vld [vmem:[#allocation7 + $0x38] sm:$0xff]
    %v249 = vld [vmem:[#allocation7 + $0x40] sm:$0xff]
    %v250 = vld [vmem:[#allocation7 + $0x48] sm:$0xff]
    %v251 = vld [vmem:[#allocation7 + $0x50] sm:$0xff]
    %v252 = vld [vmem:[#allocation7 + $0x58] sm:$0xff]
    %v253 = vld [vmem:[#allocation7 + $0x60] sm:$0xff]
    %v254 = vld [vmem:[#allocation7 + $0x68] sm:$0xff]
    %v255 = vld [vmem:[#allocation7 + $0x70] sm:$0xff]
    %v256 = vld [vmem:[#allocation7 + $0x78] sm:$0xff]
    %v257 = vld [vmem:[#allocation7 + $0x80] sm:$0xff]
    %v258 = vld [vmem:[#allocation7 + $0x88] sm:$0xff]
    %v259 = vld [vmem:[#allocation7 + $0x90] sm:$0xff]
    %v260 = vld [vmem:[#allocation7 + $0x98] sm:$0xff]
    %v261 = vld [vmem:[#allocation7 + $0xa0] sm:$0xff]
    %v262 = vld [vmem:[#allocation7 + $0xa8] sm:$0xff]
    %v263 = vld [vmem:[#allocation7 + $0xb0] sm:$0xff]
    %v264 = vld [vmem:[#allocation7 + $0xb8] sm:$0xff]
    %v265 = vld [vmem:[#allocation7 + $0xc0] sm:$0xff]
    %v266 = vld [vmem:[#allocation7 + $0xc8] sm:$0xff]
    %v267 = vld [vmem:[#allocation7 + $0xd0] sm:$0xff]
    %v268 = vld [vmem:[#allocation7 + $0xd8] sm:$0xff]
    %v269 = vld [vmem:[#allocation7 + $0xe0] sm:$0xff]
    %v270 = vld [vmem:[#allocation7 + $0xe8] sm:$0xff]
    %v271 = vld [vmem:[#allocation7 + $0xf0] sm:$0xff]
    %v272 = vld [vmem:[#allocation7 + $0xf8] sm:$0xff]
    %273 = vmatprep.subr.mxu0 %v242
    %274 = vmatpush1.msra.mxu0 %v241
    %275 = vmatprep.subr.mxu0 %v244
    %276 = vmatpush1.msra.mxu0 %v243
    %277 = vmatprep.subr.mxu0 %v246
    %278 = vmatpush1.msra.mxu0 %v245
    %279 = vmatprep.subr.mxu0 %v248
    %280 = vmatpush1.msra.mxu0 %v247
    %281 = vmatprep.subr.mxu0 %v250
    %282 = vmatpush1.msra.mxu0 %v249
    %283 = vmatprep.subr.mxu0 %v252
    %284 = vmatpush1.msra.mxu0 %v251
    %285 = vmatprep.subr.mxu0 %v254
    %286 = vmatpush1.msra.mxu0 %v253
    %287 = vmatprep.subr.mxu0 %v256
    %288 = vmatpush1.msra.mxu0 %v255
    %289 = vmatprep.subr.mxu0 %v258
    %290 = vmatpush1.msra.mxu0 %v257
    %291 = vmatprep.subr.mxu0 %v260
    %292 = vmatpush1.msra.mxu0 %v259
    %293 = vmatprep.subr.mxu0 %v262
    %294 = vmatpush1.msra.mxu0 %v261
    %295 = vmatprep.subr.mxu0 %v264
    %296 = vmatpush1.msra.mxu0 %v263
    %297 = vmatprep.subr.mxu0 %v266
    %298 = vmatpush1.msra.mxu0 %v265
    %299 = vmatprep.subr.mxu0 %v268
    %300 = vmatpush1.msra.mxu0 %v267
    %301 = vmatprep.subr.mxu0 %v270
    %302 = vmatpush1.msra.mxu0 %v269
    %303 = vmatprep.subr.mxu0 %v272
    %304 = vmatpush1.msra.mxu0 %v271
    %305 = vmatprep.subr.mxu0 0.0
    %306 = vmatpush1.msra.mxu0 0.0
    %307 = vmatprep.subr.mxu0 0.0
    %308 = vmatpush1.msra.mxu0 0.0
    %309 = vmatprep.subr.mxu0 0.0
    %310 = vmatpush1.msra.mxu0 0.0
    %311 = vmatprep.subr.mxu0 0.0
    %312 = vmatpush1.msra.mxu0 0.0
    %313 = vmatprep.subr.mxu0 0.0
    %314 = vmatpush1.msra.mxu0 0.0
    %315 = vmatprep.subr.mxu0 0.0
    %316 = vmatpush1.msra.mxu0 0.0
    %317 = vmatprep.subr.mxu0 0.0
    %318 = vmatpush1.msra.mxu0 0.0
    %319 = vmatprep.subr.mxu0 0.0
    %320 = vmatpush1.msra.mxu0 0.0
    %321 = vmatprep.subr.mxu0 0.0
    %322 = vmatpush1.msra.mxu0 0.0
    %323 = vmatprep.subr.mxu0 0.0
    %324 = vmatpush1.msra.mxu0 0.0
    %325 = vmatprep.subr.mxu0 0.0
    %326 = vmatpush1.msra.mxu0 0.0
    %327 = vmatprep.subr.mxu0 0.0
    %328 = vmatpush1.msra.mxu0 0.0
    %329 = vmatprep.subr.mxu0 0.0
    %330 = vmatpush1.msra.mxu0 0.0
    %331 = vmatprep.subr.mxu0 0.0
    %332 = vmatpush1.msra.mxu0 0.0
    %333 = vmatprep.subr.mxu0 0.0
    %334 = vmatpush1.msra.mxu0 0.0
    %335 = vmatprep.subr.mxu0 0.0
    %336 = vmatpush1.msra.mxu0 0.0
    %337 = vmatprep.mubr.f32.mxu0 0.0
    %338 = vmatmul.mubr.f32.gmra.mrb[0].mxu0 %v240
    %v339 = vpop.f32.mrb[0].mxu0
    %v340 = vadd.f32 0.0, %v339
    %v341 = vpop.f32.mrb[0].mxu0
    %v342 = vadd.f32 0.0, %v341
    %343 = vdwg.mxu0
    %v344 = vmul.f32 %v185, %v340
    %v345 = vmul.f32 %v187, %v342
    %v346 = vld [vmem:[#allocation8] sm:$0xff]
    %v347 = vld [vmem:[#allocation8 + $0x8] sm:$0xff]
    %v348 = vld [vmem:[#allocation8 + $0x10] sm:$0xff]
    %v349 = vld [vmem:[#allocation8 + $0x18] sm:$0xff]
    %v350 = vld [vmem:[#allocation8 + $0x20] sm:$0xff]
    %v351 = vld [vmem:[#allocation8 + $0x28] sm:$0xff]
    %v352 = vld [vmem:[#allocation8 + $0x30] sm:$0xff]
    %v353 = vld [vmem:[#allocation8 + $0x38] sm:$0xff]
    %v354 = vld [vmem:[#allocation8 + $0x40] sm:$0xff]
    %v355 = vld [vmem:[#allocation8 + $0x48] sm:$0xff]
    %v356 = vld [vmem:[#allocation8 + $0x50] sm:$0xff]
    %v357 = vld [vmem:[#allocation8 + $0x58] sm:$0xff]
    %v358 = vld [vmem:[#allocation8 + $0x60] sm:$0xff]
    %v359 = vld [vmem:[#allocation8 + $0x68] sm:$0xff]
    %v360 = vld [vmem:[#allocation8 + $0x70] sm:$0xff]
    %v361 = vld [vmem:[#allocation8 + $0x78] sm:$0xff]
    %v362 = vld [vmem:[#allocation8 + $0x80] sm:$0xff]
    %v363 = vld [vmem:[#allocation8 + $0x88] sm:$0xff]
    %v364 = vld [vmem:[#allocation8 + $0x90] sm:$0xff]
    %v365 = vld [vmem:[#allocation8 + $0x98] sm:$0xff]
    %v366 = vld [vmem:[#allocation8 + $0xa0] sm:$0xff]
    %v367 = vld [vmem:[#allocation8 + $0xa8] sm:$0xff]
    %v368 = vld [vmem:[#allocation8 + $0xb0] sm:$0xff]
    %v369 = vld [vmem:[#allocation8 + $0xb8] sm:$0xff]
    %v370 = vld [vmem:[#allocation8 + $0xc0] sm:$0xff]
    %v371 = vld [vmem:[#allocation8 + $0xc8] sm:$0xff]
    %v372 = vld [vmem:[#allocation8 + $0xd0] sm:$0xff]
    %v373 = vld [vmem:[#allocation8 + $0xd8] sm:$0xff]
    %v374 = vld [vmem:[#allocation8 + $0xe0] sm:$0xff]
    %v375 = vld [vmem:[#allocation8 + $0xe8] sm:$0xff]
    %v376 = vld [vmem:[#allocation8 + $0xf0] sm:$0xff]
    %v377 = vld [vmem:[#allocation8 + $0xf8] sm:$0xff]
    %378 = vmatprep.subr.mxu0 0.0
    %379 = vmatpush1.msra.mxu0 %v346
    %380 = vmatprep.subr.mxu0 0.0
    %381 = vmatpush1.msra.mxu0 %v347
    %382 = vmatprep.subr.mxu0 0.0
    %383 = vmatpush1.msra.mxu0 %v348
    %384 = vmatprep.subr.mxu0 0.0
    %385 = vmatpush1.msra.mxu0 %v349
    %386 = vmatprep.subr.mxu0 0.0
    %387 = vmatpush1.msra.mxu0 %v350
    %388 = vmatprep.subr.mxu0 0.0
    %389 = vmatpush1.msra.mxu0 %v351
    %390 = vmatprep.subr.mxu0 0.0
    %391 = vmatpush1.msra.mxu0 %v352
    %392 = vmatprep.subr.mxu0 0.0
    %393 = vmatpush1.msra.mxu0 %v353
    %394 = vmatprep.subr.mxu0 0.0
    %395 = vmatpush1.msra.mxu0 %v354
    %396 = vmatprep.subr.mxu0 0.0
    %397 = vmatpush1.msra.mxu0 %v355
    %398 = vmatprep.subr.mxu0 0.0
    %399 = vmatpush1.msra.mxu0 %v356
    %400 = vmatprep.subr.mxu0 0.0
    %401 = vmatpush1.msra.mxu0 %v357
    %402 = vmatprep.subr.mxu0 0.0
    %403 = vmatpush1.msra.mxu0 %v358
    %404 = vmatprep.subr.mxu0 0.0
    %405 = vmatpush1.msra.mxu0 %v359
    %406 = vmatprep.subr.mxu0 0.0
    %407 = vmatpush1.msra.mxu0 %v360
    %408 = vmatprep.subr.mxu0 0.0
    %409 = vmatpush1.msra.mxu0 %v361
    %410 = vmatprep.subr.mxu0 0.0
    %411 = vmatpush1.msra.mxu0 %v362
    %412 = vmatprep.subr.mxu0 0.0
    %413 = vmatpush1.msra.mxu0 %v363
    %414 = vmatprep.subr.mxu0 0.0
    %415 = vmatpush1.msra.mxu0 %v364
    %416 = vmatprep.subr.mxu0 0.0
    %417 = vmatpush1.msra.mxu0 %v365
    %418 = vmatprep.subr.mxu0 0.0
    %419 = vmatpush1.msra.mxu0 %v366
    %420 = vmatprep.subr.mxu0 0.0
    %421 = vmatpush1.msra.mxu0 %v367
    %422 = vmatprep.subr.mxu0 0.0
    %423 = vmatpush1.msra.mxu0 %v368
    %424 = vmatprep.subr.mxu0 0.0
    %425 = vmatpush1.msra.mxu0 %v369
    %426 = vmatprep.subr.mxu0 0.0
    %427 = vmatpush1.msra.mxu0 %v370
    %428 = vmatprep.subr.mxu0 0.0
    %429 = vmatpush1.msra.mxu0 %v371
    %430 = vmatprep.subr.mxu0 0.0
    %431 = vmatpush1.msra.mxu0 %v372
    %432 = vmatprep.subr.mxu0 0.0
    %433 = vmatpush1.msra.mxu0 %v373
    %434 = vmatprep.subr.mxu0 0.0
    %435 = vmatpush1.msra.mxu0 %v374
    %436 = vmatprep.subr.mxu0 0.0
    %437 = vmatpush1.msra.mxu0 %v375
    %438 = vmatprep.subr.mxu0 0.0
    %439 = vmatpush1.msra.mxu0 %v376
    %440 = vmatprep.subr.mxu0 0.0
    %441 = vmatpush1.msra.mxu0 %v377
    %442 = vmatprep.mubr.f32.mxu0 %v345
    %443 = vmatmul.mubr.f32.gmra.mrb[0].mxu0 %v344
    %v444 = vpop.f32.mrb[0].mxu0
    %v445 = vadd.f32 0.0, %v444
    %v446 = vpop.f32.mrb[0].mxu0
    %447 = vdwg.mxu0
    %448 = vst [vmem:[#allocation11] sm:$0xff] %v445
    %v449 = vld [vmem:[#allocation10] sm:$0xff]
    %v450 = vld [vmem:[#allocation10 + $0x8] sm:$0xff]
    %v451 = vld [vmem:[#allocation10 + $0x10] sm:$0xff]
    %v452 = vld [vmem:[#allocation10 + $0x18] sm:$0xff]
    %v453 = vld [vmem:[#allocation10 + $0x20] sm:$0xff]
    %v454 = vld [vmem:[#allocation10 + $0x28] sm:$0xff]
    %v455 = vld [vmem:[#allocation10 + $0x30] sm:$0xff]
    %v456 = vld [vmem:[#allocation10 + $0x38] sm:$0xff]
    %v457 = vld [vmem:[#allocation10 + $0x40] sm:$0xff]
    %v458 = vld [vmem:[#allocation10 + $0x48] sm:$0xff]
    %v459 = vld [vmem:[#allocation10 + $0x50] sm:$0xff]
    %v460 = vld [vmem:[#allocation10 + $0x58] sm:$0xff]
    %v461 = vld [vmem:[#allocation10 + $0x60] sm:$0xff]
    %v462 = vld [vmem:[#allocation10 + $0x68] sm:$0xff]
    %v463 = vld [vmem:[#allocation10 + $0x70] sm:$0xff]
    %v464 = vld [vmem:[#allocation10 + $0x78] sm:$0xff]
    %v465 = vld [vmem:[#allocation10 + $0x80] sm:$0xff]
    %v466 = vld [vmem:[#allocation10 + $0x88] sm:$0xff]
    %v467 = vld [vmem:[#allocation10 + $0x90] sm:$0xff]
    %v468 = vld [vmem:[#allocation10 + $0x98] sm:$0xff]
    %v469 = vld [vmem:[#allocation10 + $0xa0] sm:$0xff]
    %v470 = vld [vmem:[#allocation10 + $0xa8] sm:$0xff]
    %v471 = vld [vmem:[#allocation10 + $0xb0] sm:$0xff]
    %v472 = vld [vmem:[#allocation10 + $0xb8] sm:$0xff]
    %v473 = vld [vmem:[#allocation10 + $0xc0] sm:$0xff]
    %v474 = vld [vmem:[#allocation10 + $0xc8] sm:$0xff]
    %v475 = vld [vmem:[#allocation10 + $0xd0] sm:$0xff]
    %v476 = vld [vmem:[#allocation10 + $0xd8] sm:$0xff]
    %v477 = vld [vmem:[#allocation10 + $0xe0] sm:$0xff]
    %v478 = vld [vmem:[#allocation10 + $0xe8] sm:$0xff]
    %v479 = vld [vmem:[#allocation10 + $0xf0] sm:$0xff]
    %v480 = vld [vmem:[#allocation10 + $0xf8] sm:$0xff]
    %481 = vmatprep.subr.mxu0 0.0
    %482 = vmatpush1.msra.mxu0 %v449
    %483 = vmatprep.subr.mxu0 0.0
    %484 = vmatpush1.msra.mxu0 %v450
    %485 = vmatprep.subr.mxu0 0.0
    %486 = vmatpush1.msra.mxu0 %v451
    %487 = vmatprep.subr.mxu0 0.0
    %488 = vmatpush1.msra.mxu0 %v452
    %489 = vmatprep.subr.mxu0 0.0
    %490 = vmatpush1.msra.mxu0 %v453
    %491 = vmatprep.subr.mxu0 0.0
    %492 = vmatpush1.msra.mxu0 %v454
    %493 = vmatprep.subr.mxu0 0.0
    %494 = vmatpush1.msra.mxu0 %v455
    %495 = vmatprep.subr.mxu0 0.0
    %496 = vmatpush1.msra.mxu0 %v456
    %497 = vmatprep.subr.mxu0 0.0
    %498 = vmatpush1.msra.mxu0 %v457
    %499 = vmatprep.subr.mxu0 0.0
    %500 = vmatpush1.msra.mxu0 %v458
    %501 = vmatprep.subr.mxu0 0.0
    %502 = vmatpush1.msra.mxu0 %v459
    %503 = vmatprep.subr.mxu0 0.0
    %504 = vmatpush1.msra.mxu0 %v460
    %505 = vmatprep.subr.mxu0 0.0
    %506 = vmatpush1.msra.mxu0 %v461
    %507 = vmatprep.subr.mxu0 0.0
    %508 = vmatpush1.msra.mxu0 %v462
    %509 = vmatprep.subr.mxu0 0.0
    %510 = vmatpush1.msra.mxu0 %v463
    %511 = vmatprep.subr.mxu0 0.0
    %512 = vmatpush1.msra.mxu0 %v464
    %513 = vmatprep.subr.mxu0 0.0
    %514 = vmatpush1.msra.mxu0 %v465
    %515 = vmatprep.subr.mxu0 0.0
    %516 = vmatpush1.msra.mxu0 %v466
    %517 = vmatprep.subr.mxu0 0.0
    %518 = vmatpush1.msra.mxu0 %v467
    %519 = vmatprep.subr.mxu0 0.0
    %520 = vmatpush1.msra.mxu0 %v468
    %521 = vmatprep.subr.mxu0 0.0
    %522 = vmatpush1.msra.mxu0 %v469
    %523 = vmatprep.subr.mxu0 0.0
    %524 = vmatpush1.msra.mxu0 %v470
    %525 = vmatprep.subr.mxu0 0.0
    %526 = vmatpush1.msra.mxu0 %v471
    %527 = vmatprep.subr.mxu0 0.0
    %528 = vmatpush1.msra.mxu0 %v472
    %529 = vmatprep.subr.mxu0 0.0
    %530 = vmatpush1.msra.mxu0 %v473
    %531 = vmatprep.subr.mxu0 0.0
    %532 = vmatpush1.msra.mxu0 %v474
    %533 = vmatprep.subr.mxu0 0.0
    %534 = vmatpush1.msra.mxu0 %v475
    %535 = vmatprep.subr.mxu0 0.0
    %536 = vmatpush1.msra.mxu0 %v476
    %537 = vmatprep.subr.mxu0 0.0
    %538 = vmatpush1.msra.mxu0 %v477
    %539 = vmatprep.subr.mxu0 0.0
    %540 = vmatpush1.msra.mxu0 %v478
    %541 = vmatprep.subr.mxu0 0.0
    %542 = vmatpush1.msra.mxu0 %v479
    %543 = vmatprep.subr.mxu0 0.0
    %544 = vmatpush1.msra.mxu0 %v480
    %545 = vmatprep.mubr.f32.mxu0 %v345
    %546 = vmatmul.mubr.f32.gmra.mrb[0].mxu0 %v344
    %v547 = vpop.f32.mrb[0].mxu0
    %v548 = vadd.f32 0.0, %v547
    %v549 = vpop.f32.mrb[0].mxu0
    %550 = vdwg.mxu0
    %v551 = vtanh.pop %v548
    %v552 = vadd.f32 %v551, 1.0
    %v553 = vmul.f32 %v552, 3.5
    %v554 = vadd.f32 %v553, -5.0
    %555 = vst [vmem:[#allocation12] sm:$0xff] %v554
    // Predicated region
    $region46: #{tpu_custom_call.1} parent=1 // pred_check
      _
    $region47: #{tpu_custom_call.1} parent=1 // pred_check_branch
      %557 = sbr.rel (0) target = $region49
    $region48: #{tpu_custom_call.1} parent=1 // pred_region
      %s559 = ssub.s32 128, 128
      %560 = vsyncadd [#allocation4], %s559
      %s562 = sshll.u32 [#allocation11], 4
      %s563 = int_to_ptr.vmem [resolvable:$true] %s562
      %565 = dma.vmem_to_hbm [thread:$0]  %s563, 128, %s6, [#allocation4]
    $region49: #{tpu_custom_call.1} parent=1 // pred_fallthru
      _
    // Predicated region
    $region50: #{tpu_custom_call.1} parent=1 // pred_check
      _
    $region51: #{tpu_custom_call.1} parent=1 // pred_check_branch
      %567 = sbr.rel (0) target = $region53
    $region52: #{tpu_custom_call.1} parent=1 // pred_region
      %s569 = ssub.s32 128, 128
      %570 = vsyncadd [#allocation13], %s569
      %s572 = sshll.u32 [#allocation12], 4
      %s573 = int_to_ptr.vmem [resolvable:$true] %s572
      %575 = dma.vmem_to_hbm [thread:$0]  %s573, 128, %s7, [#allocation13]
    $region53: #{tpu_custom_call.1} parent=1 // pred_fallthru
      _
    // Predicated region
    $region54: #{tpu_custom_call.1} parent=1 // pred_check
      _
    $region55: #{tpu_custom_call.1} parent=1 // pred_check_branch
      %577 = sbr.rel (0) target = $region57
    $region56: #{tpu_custom_call.1} parent=1 // pred_region
      %578 = dma.done [#allocation4], 128
    $region57: #{tpu_custom_call.1} parent=1 // pred_fallthru
      _
    // Predicated region
    $region58: #{tpu_custom_call.1} parent=1 // pred_check
      _
    $region59: #{tpu_custom_call.1} parent=1 // pred_check_branch
      %580 = sbr.rel (0) target = $region61
    $region60: #{tpu_custom_call.1} parent=1 // pred_region
      %581 = dma.done [#allocation13], 128
    $region61: #{tpu_custom_call.1} parent=1 // pred_fallthru
      _
    %582 = vsyncpa [#allocation3], 1
    %583 = vsyncpa [#allocation6], 1
    %584 = vsyncpa [#allocation9], 1
    %585 = vsyncpa [#allocation4], 1
    %586 = vsyncpa [#allocation13], 1

</llo_original>
